<compile_context>
chip_gen: v5e
topology: v5e:2x2
jax: 0.10.0
libtpu: 0.0.40
codegen_flags: <defaults>
</compile_context>

<pallas_src>
import jax
import jax.numpy as jnp
from jax.experimental import pallas as pl
from jax.experimental.pallas import tpu as pltpu


def _roll_copy_kernel(shift_ref, x_ref, o_ref):
    # The batch-axis gather lives in the input BlockSpec index_map; the body
    # is a dense (S, T) tile copy.
    del shift_ref  # consumed by the index_map
    o_ref[...] = x_ref[...]


# itemsize -> sublanes of one packed (sublane, 128) vreg tile
_SUBLANES = {4: 8, 2: 16, 1: 32}


def _vmem_budget():
    """(tile_cap_bytes, vmem_limit_bytes) sized per TPU generation."""
    vmem = 0
    try:
        vmem = int(pltpu.get_tpu_info().vmem_capacity_bytes)
    except Exception:
        vmem = 0
    if vmem >= 100 * 1024 * 1024:
        # v5e / v6e: 128 MiB physical VMEM -> big tiles amortize the ~0.35us
        # per-grid-step overhead; 4 x 8 MiB live buffers well under 64 MiB.
        return 8 * 1024 * 1024, 64 * 1024 * 1024
    # v7x (64 MiB per TensorCore) or unknown: stay conservative.
    return 4 * 1024 * 1024, 32 * 1024 * 1024


def roll_batch(x, shift, tile_cap_bytes=None):
    """torch.roll(x, shift, dims=0) for an N-D array, on TPU via Pallas."""
    orig_shape = x.shape
    B = int(orig_shape[0])
    if B <= 1:
        return x  # roll along a length-<=1 axis is the identity

    F = 1
    for d in orig_shape[1:]:
        F *= int(d)
    itemsize = jnp.dtype(x.dtype).itemsize
    shift_i32 = jnp.asarray(shift, jnp.int32)

    S = _SUBLANES.get(itemsize)
    row_bytes = F * itemsize
    cap, vmem_limit = _vmem_budget()
    if tile_cap_bytes is not None:
        cap = int(tile_cap_bytes)

    # Fallbacks (pure-memory op; let XLA handle the regimes Pallas does not
    # win): lane-hostile rows, unsupported dtypes, or huge-B / tiny-row where
    # per-row grid-step overhead dominates the HBM traffic.
    if (S is None
            or F == 0
            or F % S != 0
            or (F // S) < 128
            or (B > 256 and row_bytes < 256 * 1024)):
        return jnp.roll(x, shift_i32, axis=0)

    Fs = F // S

    # Normalize shift into [0, B) (floor mod) so the index_map operand is
    # always non-negative and in range, for negative or |shift| >= B values.
    shift_arr = jnp.mod(shift_i32, B).reshape((1,))

    # Feature tile: whole row if it fits the cap (fully contiguous DMA),
    # otherwise the largest multiple-of-128 lane width under the cap; the
    # non-dividing tail block is handled by the cdiv grid (masked writeback).
    if S * Fs * itemsize <= cap:
        T = Fs
    else:
        T = max(128, (cap // (S * itemsize * 128)) * 128)
    grid = (B, pl.cdiv(Fs, T))

    x3 = x.reshape(B, S, Fs)  # sublane- and lane-dense layout

    grid_spec = pltpu.PrefetchScalarGridSpec(
        num_scalar_prefetch=1,
        grid=grid,
        in_specs=[
            # output row i <- input row (i - shift) mod B; shift in [0, B).
            pl.BlockSpec((1, S, T), lambda i, j, s: ((i + B - s[0]) % B, 0, j)),
        ],
        out_specs=pl.BlockSpec((1, S, T), lambda i, j, s: (i, 0, j)),
    )

    out3 = pl.pallas_call(
        _roll_copy_kernel,
        out_shape=jax.ShapeDtypeStruct((B, S, Fs), x.dtype),
        grid_spec=grid_spec,
        compiler_params=pltpu.CompilerParams(
            # Every (i, j) writes a distinct output block -> fully parallel;
            # on v7x both TensorCores drive DMAs (overhead hiding, shared HBM).
            dimension_semantics=("parallel", "parallel"),
            vmem_limit_bytes=vmem_limit,
        ),
        cost_estimate=pl.CostEstimate(
            flops=0,
            transcendentals=0,
            bytes_accessed=2 * B * F * itemsize,
        ),
    )(shift_arr, x3)

    return out3.reshape(orig_shape)


class Roll:
    """JAX/Pallas port of the PyTorch Roll augmentation module."""

    def __init__(self, mean, std):
        self.mean = float(mean)
        self.std = float(std)
        self.training = True

    def __call__(self, x, key):
        if not self.training:
            return x
        # shift = Normal(mean, std) truncated toward zero (matches .int()).
        shift = (jax.random.normal(key, (), jnp.float32) * self.std
                 + self.mean).astype(jnp.int32)
        return roll_batch(x, shift)


if __name__ == "__main__":
    key = jax.random.PRNGKey(0)
    k_x, k_shift = jax.random.split(key)

    # Small shapes consistent with the module's forward (4-D NCHW batch).
    B, C, H, W = 2, 4, 16, 16
    x = jax.random.normal(k_x, (B, C, H, W), dtype=jnp.float32)

    module = Roll(mean=1.0, std=2.0)
    module.training = True

    out = jax.block_until_ready(module(x, k_shift))

    # Reference check against jnp.roll with the same deterministic shift.
    shift_ref = int((jax.random.normal(k_shift, (), jnp.float32) * module.std
                     + module.mean).astype(jnp.int32))
    expected = jnp.roll(x, shift_ref, axis=0)
    assert out.shape == x.shape and out.dtype == x.dtype
    assert jnp.array_equal(out, expected), "Pallas roll mismatch vs jnp.roll"

    # Negative shifts and |shift| >= B through the kernel path.
    for s in (-1, -3, 2, 5):
        got = jax.block_until_ready(roll_batch(x, s))
        assert jnp.array_equal(got, jnp.roll(x, s, axis=0)), f"shift={s} mismatch"

    # Multi-feature-block path with a masked tail block (Fs=192, T=128).
    x_tail = jax.random.normal(jax.random.PRNGKey(1), (3, 8, 8, 24),
                               dtype=jnp.float32)
    got_tail = jax.block_until_ready(
        roll_batch(x_tail, -2, tile_cap_bytes=128 * 8 * 4))
    assert jnp.array_equal(got_tail, jnp.roll(x_tail, -2, axis=0))

    # bf16 path (sublane packing S=16).
    x_bf16 = jax.random.normal(jax.random.PRNGKey(2), (2, 8, 16, 16),
                               dtype=jnp.float32).astype(jnp.bfloat16)
    got_bf16 = jax.block_until_ready(roll_batch(x_bf16, 1))
    assert jnp.array_equal(got_bf16, jnp.roll(x_bf16, 1, axis=0))

    # Eval mode is the identity (no kernel needed).
    module.training = False
    out_eval = jax.block_until_ready(module(x, k_shift))
    assert jnp.array_equal(out_eval, x)

    print("KERNEL_OK")
</pallas_src>

<mosaic_0001>
module attributes {stable_mosaic.version = 11 : i64} {
  func.func @_roll_copy_kernel(%arg0: i32, %arg1: i32, %arg2: memref<1xi32, #tpu.memory_space<smem>>, %arg3: memref<1x8x128xf32, #tpu.memory_space<vmem>>, %arg4: memref<1x8x128xf32, #tpu.memory_space<vmem>>) attributes {dimension_semantics = [#tpu.dimension_semantics<parallel>, #tpu.dimension_semantics<parallel>], iteration_bounds = array<i64: 2, 1>, scalar_prefetch = 1 : i64, scratch_operands = 0 : i64, tpu.core_type = #tpu.core_type<tc>, window_params = [{transform_indices = @transform_0, window_bounds = array<i64: 1, 8, 128>}, {transform_indices = @transform_1, window_bounds = array<i64: 1, 8, 128>}]} {
    %c0 = arith.constant 0 : index
    %c0_0 = arith.constant 0 : index
    %c0_1 = arith.constant 0 : index
    %0 = vector.load %arg3[%c0, %c0_0, %c0_1] : memref<1x8x128xf32, #tpu.memory_space<vmem>>, vector<1x8x128xf32>
    %c0_2 = arith.constant 0 : index
    %c0_3 = arith.constant 0 : index
    %c0_4 = arith.constant 0 : index
    %1 = vector.load %arg4[%c0_2, %c0_3, %c0_4] : memref<1x8x128xf32, #tpu.memory_space<vmem>>, vector<1x8x128xf32>
    tpu.vector_store %arg4[%c0_2, %c0_3, %c0_4], %0 {strides = array<i32>} : memref<1x8x128xf32, #tpu.memory_space<vmem>>, vector<1x8x128xf32>,
    return
  }
  func.func @transform_0(%arg0: i32, %arg1: i32, %arg2: memref<1xi32, #tpu.memory_space<smem>>) -> (i32, i32, i32) {
    %c2_i32 = arith.constant 2 : i32
    %0 = arith.addi %arg0, %c2_i32 : i32
    %c0 = arith.constant 0 : index
    %1 = memref.load %arg2[%c0] : memref<1xi32, #tpu.memory_space<smem>>
    %2 = arith.subi %0, %1 : i32
    %c2_i32_0 = arith.constant 2 : i32
    %c0_i32 = arith.constant 0 : i32
    %3 = arith.cmpi eq, %c2_i32_0, %c0_i32 : i32
    %c1_i32 = arith.constant 1 : i32
    %4 = arith.select %3, %c1_i32, %c2_i32_0 : i32
    %5 = arith.remsi %2, %4 : i32
    %c0_i32_1 = arith.constant 0 : i32
    %6 = arith.cmpi ne, %5, %c0_i32_1 : i32
    %c0_i32_2 = arith.constant 0 : i32
    %7 = arith.cmpi slt, %5, %c0_i32_2 : i32
    %c0_i32_3 = arith.constant 0 : i32
    %8 = arith.cmpi slt, %4, %c0_i32_3 : i32
    %9 = arith.xori %7, %8 : i1
    %10 = arith.andi %9, %6 : i1
    %11 = arith.addi %5, %4 : i32
    %12 = arith.select %10, %11, %5 : i32
    %c0_i32_4 = arith.constant 0 : i32
    %c0_i32_5 = arith.constant 0 : i32
    return %12, %c0_i32_4, %arg1 : i32, i32, i32
  }
  func.func @transform_1(%arg0: i32, %arg1: i32, %arg2: memref<1xi32, #tpu.memory_space<smem>>) -> (i32, i32, i32) {
    %c0_i32 = arith.constant 0 : i32
    %c0_i32_0 = arith.constant 0 : i32
    return %arg0, %c0_i32, %arg1 : i32, i32, i32
  }
}

</mosaic_0001>

<llo_original>
// kernel: tpu_custom_call.1
$region0: #{tpu_custom_call.1}
  #allocation0 [shape = 'u32[]', space=smem, size = 0x4, offset = 0x4, fixed_abs, tag = 'smem constant byte address 0x4 - core index']
  #allocation1 [shape = 'u32[72,128]{1,0:T(1,128)}', space=vmem, size = 0x9000, scoped, tag = 'internal scratch']
  #allocation2 [shape = 's32[1]{0}', space=sflag, size = 0x4, scoped, tag = 'scoped memory for tpu_custom_call.1']
  #allocation3 [shape = 's32[1]{0:T(128)S(6)}', space=smem, size = 0x200, scoped, tag = 'prefetched SMEM operand 0']
  %s0 = inlined_call_operand.<no memory space> [shape: s32[1], index: 0, kind: input, shape index: {}]
  %s1 = inlined_call_operand.hbm [shape: f32[2,8,128], index: 1, kind: input, shape index: {}]
  %s2 = inlined_call_operand.hbm [shape: f32[2,8,128], index: 2, kind: output, shape index: {}]
  %s3 = sld [smem:[#allocation0]]
  $region41: #{tpu_custom_call.1} parent=0
    _
  %s5 = ssub.s32 1, %s3
  %s6 = scalar_select 0, %s5, %s3
  %7 = sst [smem:[#allocation3]] %s0
  $region1: #{tpu_custom_call.1} parent=0
    #allocation4 [shape = 'u8[8192]{0}', space=vmem, size = 0x2000, scoped, tag = 'input window, operand 1']
    #allocation5 [shape = 's32[2]{0}', space=sflag, size = 0x8, scoped, tag = 'scoped memory for tpu_custom_call.1']
    #allocation6 [shape = 's32[2]{0}', space=sflag, size = 0x8, scoped, tag = 'scoped memory for tpu_custom_call.1']
    #allocation7 [shape = 'u8[8192]{0}', space=vmem, size = 0x2000, scoped, tag = 'output window, operand 0']
    %8 = vsyncpa [#allocation5], 0
    %s9 = scalar_lea.sflag [#allocation5], 1
    %10 = vsyncpa %s9, 0
    %11 = vsyncpa [#allocation6], 0
    %s12 = scalar_lea.sflag [#allocation6], 1
    %13 = vsyncpa %s12, 0
    loop: start=0, step=1, limit=4
    $region2: #{tpu_custom_call.1} parent=1 // loop_pre_header
      _
    $region3: #{tpu_custom_call.1} parent=1 // loop_header
      %s15 = sphi 0, %s19
      %p16 = scmp.ge.s32.totalorder %s15, 4
      %s22 = sphi 0, %s34
      %s23 = sphi 0, %s30
      %s24 = sphi 0, %s22
      %s25 = sphi 0, %s23
      %s26 = sphi 0, %s24
      %s27 = sphi 0, %s25
      %s69 = sphi 0, %s71
      %s72 = sphi 0, %s69
      %s73 = sphi 0, %s72
      %s89 = sphi 0, %s73
      %s97 = sphi 0, %s99
      %s100 = sphi 0, %s97
      %s101 = sphi 0, %s100
      %s117 = sphi 0, %s101
    $region4: #{tpu_custom_call.1} parent=1 // loop_header_branch
      %18 = sbr.rel (%p16) target = $region8
    $region5: #{tpu_custom_call.1} parent=1 // loop_body
      %s20 = ssub.s32 %s15, 1
      %s21 = ssub.s32 %s15, 2
      %s28 = sadd.s32 1, %s23
      %p29 = scmp.ge.s32.totalorder %s28, 1
      %s30 = scalar_select %p29, 0, %s28
      %s31 = sadd.s32 1, %s22
      %s32 = scalar_select %p29, %s31, %s22
      %p33 = scmp.ge.s32.totalorder %s32, 2
      %s34 = scalar_select %p33, 0, %s32
      %s35 = sadd.s32 %s22, 2
      %s36 = sld [smem:[#allocation3]]
      %s37 = ssub.s32 %s35, %s36
      %p38 = scmp.lt.s32.totalorder %s37, 0
      %s39 = ssub.s32 0, %s37
      %s40 = scalar_select %p38, %s39, %s37
      %s41 = sand.u32 %s40, 1
      %s42 = ssub.s32 0, %s41
      %s43 = scalar_select %p38, %s42, %s41
      %p44 = scmp.ne.s32.totalorder %s43, 0
      %p45 = scmp.lt.s32.totalorder %s43, 0
      %p46 = pnand %p45, %p44
      %p47 = pneg %p46
      %s48 = sadd.s32 %s43, 2
      %s49 = scalar_select %p47, %s48, %s43
      %s50 = sadd.s32 %s34, 2
      %s51 = sld [smem:[#allocation3]]
      %s52 = ssub.s32 %s50, %s51
      %p53 = scmp.lt.s32.totalorder %s52, 0
      %s54 = ssub.s32 0, %s52
      %s55 = scalar_select %p53, %s54, %s52
      %s56 = sand.u32 %s55, 1
      %s57 = ssub.s32 0, %s56
      %s58 = scalar_select %p53, %s57, %s56
      %p59 = scmp.ne.s32.totalorder %s58, 0
      %p60 = scmp.lt.s32.totalorder %s58, 0
      %p61 = pnand %p60, %p59
      %p62 = pneg %p61
      %s63 = sadd.s32 %s58, 2
      %s64 = scalar_select %p62, %s63, %s58
      %s65 = ssub.s32 %s49, %s64
      %s66 = ssub.s32 %s23, %s30
      %s67 = sor.u32 %s65, %s66
      %p68 = scmp.eq.s32.totalorder %s67, 0
      %s70 = sadd.s32 %s69, 1
      %s71 = scalar_select %p68, %s69, %s70
      %p74 = pneg %p68
      %p75 = scmp.eq.s32.totalorder %s15, 1
      %p76 = por %p74, %p75
      %p77 = scmp.ne.s32.totalorder %s69, %s72
      %p78 = scmp.eq.s32.totalorder %s15, 0
      %p79 = por %p77, %p78
      %p80 = scmp.ne.s32.totalorder %s69, %s72
      %p81 = scmp.eq.s32.totalorder %s20, 1
      %p82 = por %p80, %p81
      %p83 = scmp.ne.s32.totalorder %s72, %s73
      %p84 = scmp.eq.s32.totalorder %s20, 0
      %p85 = por %p83, %p84
      %p86 = scmp.ne.s32.totalorder %s72, %s73
      %p87 = scmp.eq.s32.totalorder %s21, 1
      %p88 = por %p86, %p87
      %p90 = scmp.ne.s32.totalorder %s73, %s89
      %p91 = scmp.eq.s32.totalorder %s21, 0
      %p92 = por %p90, %p91
      %s93 = ssub.s32 %s22, %s34
      %s94 = ssub.s32 %s23, %s30
      %s95 = sor.u32 %s93, %s94
      %p96 = scmp.eq.s32.totalorder %s95, 0
      %s98 = sadd.s32 %s97, 1
      %s99 = scalar_select %p96, %s97, %s98
      %p102 = pneg %p96
      %p103 = scmp.eq.s32.totalorder %s15, 1
      %p104 = por %p102, %p103
      %p105 = scmp.ne.s32.totalorder %s97, %s100
      %p106 = scmp.eq.s32.totalorder %s15, 0
      %p107 = por %p105, %p106
      %p108 = scmp.ne.s32.totalorder %s97, %s100
      %p109 = scmp.eq.s32.totalorder %s20, 1
      %p110 = por %p108, %p109
      %p111 = scmp.ne.s32.totalorder %s100, %s101
      %p112 = scmp.eq.s32.totalorder %s20, 0
      %p113 = por %p111, %p112
      %p114 = scmp.ne.s32.totalorder %s100, %s101
      %p115 = scmp.eq.s32.totalorder %s21, 1
      %p116 = por %p114, %p115
      %p118 = scmp.ne.s32.totalorder %s101, %s117
      %p119 = scmp.eq.s32.totalorder %s21, 0
      %p120 = por %p118, %p119
      %p121 = scmp.le.s32.totalorder 1, %s15
      %p122 = scmp.lt.s32.totalorder %s15, 3
      %p123 = pnand %p121, %p122
      %p124 = pneg %p123
      // Predicated region
      $region9: #{tpu_custom_call.1} parent=5 // pred_check
        _
      $region10: #{tpu_custom_call.1} parent=5 // pred_check_branch
        %126 = sbr.rel (%p123) target = $region12
      $region11: #{tpu_custom_call.1} parent=5 // pred_region
        %s127 = ssub.s32 %s15, 1
      $region12: #{tpu_custom_call.1} parent=5 // pred_fallthru
        _
      %p128 = scmp.lt.s32.totalorder %s15, 2
      // Predicated region
      $region13: #{tpu_custom_call.1} parent=5 // pred_check
        %p129 = pneg %p128
      $region14: #{tpu_custom_call.1} parent=5 // pred_check_branch
        %131 = sbr.rel (%p129) target = $region16
      $region15: #{tpu_custom_call.1} parent=5 // pred_region
        // Predicated region
        $region17: #{tpu_custom_call.1} parent=15 // pred_check
          %p132 = pneg %p79
        $region18: #{tpu_custom_call.1} parent=15 // pred_check_branch
          %134 = sbr.rel (%p132) target = $region20
        $region19: #{tpu_custom_call.1} parent=15 // pred_region
          %s135 = sand.u32 %s69, 1
          %s136 = scalar_lea.sflag [#allocation5], %s135
          %s137 = sand.u32 %s69, 1
          %s138 = smul.addr %s137, 8
          %s139 = scalar_lea.vmem [#allocation4], %s138
          %s140 = sadd.s32 %s22, 2
          %s141 = sld [smem:[#allocation3]]
          %s142 = ssub.s32 %s140, %s141
          %p143 = scmp.lt.s32.totalorder %s142, 0
          %s144 = ssub.s32 0, %s142
          %s145 = scalar_select %p143, %s144, %s142
          %s146 = sand.u32 %s145, 1
          %s147 = ssub.s32 0, %s146
          %s148 = scalar_select %p143, %s147, %s146
          %p149 = scmp.ne.s32.totalorder %s148, 0
          %p150 = scmp.lt.s32.totalorder %s148, 0
          %p151 = pnand %p150, %p149
          %p152 = pneg %p151
          %s153 = sadd.s32 %s148, 2
          %s154 = scalar_select %p152, %s153, %s148
          %156 = vsyncadd %s136, 0
          %s157 = sadd.s32 %s23, %s154
          %s158 = smul.addr %s157, 8
          %s159 = scalar_lea.hbm %s1, %s158
          %s161 = sshll.u32 %s159, 4
          %s162 = int_to_ptr.hbm [resolvable:$true] %s161
          %s163 = sshll.u32 %s139, 4
          %s164 = int_to_ptr.vmem [resolvable:$true] %s163
          %166 = dma.hbm_to_vmem [thread:$0]  %s162, 128, %s164, %s136
        $region20: #{tpu_custom_call.1} parent=15 // pred_fallthru
          _
      $region16: #{tpu_custom_call.1} parent=5 // pred_fallthru
        _
      %p167 = scmp.le.s32.totalorder 1, %s15
      %p168 = scmp.lt.s32.totalorder %s15, 3
      %p169 = pnand %p167, %p168
      %p170 = pneg %p169
      // Predicated region
      $region21: #{tpu_custom_call.1} parent=5 // pred_check
        _
      $region22: #{tpu_custom_call.1} parent=5 // pred_check_branch
        %172 = sbr.rel (%p169) target = $region24
      $region23: #{tpu_custom_call.1} parent=5 // pred_region
        %s173 = ssub.s32 %s15, 1
        %s174 = sand.u32 %s72, 1
        %s175 = scalar_lea.sflag [#allocation5], %s174
        %s176 = sand.u32 %s72, 1
        %s177 = smul.addr %s176, 8
        %s178 = scalar_lea.vmem [#allocation4], %s177
        // Predicated region
        $region25: #{tpu_custom_call.1} parent=23 // pred_check
          %p179 = pneg %p85
        $region26: #{tpu_custom_call.1} parent=23 // pred_check_branch
          %181 = sbr.rel (%p179) target = $region28
        $region27: #{tpu_custom_call.1} parent=23 // pred_region
          %183 = dma.done %s175, 128
        $region28: #{tpu_custom_call.1} parent=23 // pred_fallthru
          _
        %s184 = sand.u32 %s72, 1
        %s185 = scalar_lea.sflag [#allocation5], %s184
        %s186 = sand.u32 %s72, 1
        %s187 = smul.addr %s186, 8
        %s188 = scalar_lea.vmem [#allocation4], %s187
        %p189 = pneg %p85
        %p190 = pneg %p82
        %p191 = pneg %p113
        %p192 = pneg %p110
        %s193 = sand.u32 %s100, 1
        %s194 = scalar_lea.sflag [#allocation6], %s193
        %s195 = sand.u32 %s100, 1
        %s196 = smul.addr %s195, 8
        %s197 = scalar_lea.vmem [#allocation7], %s196
        %s198 = sadd.s32 %s24, 2
        %s199 = sld [smem:[#allocation3]]
        %s200 = ssub.s32 %s198, %s199
        %p201 = scmp.lt.s32.totalorder %s200, 0
        %s202 = ssub.s32 0, %s200
        %s203 = scalar_select %p201, %s202, %s200
        %s204 = sand.u32 %s203, 1
        %s205 = ssub.s32 0, %s204
        %s206 = scalar_select %p201, %s205, %s204
        %p207 = scmp.ne.s32.totalorder %s206, 0
        %p208 = scmp.lt.s32.totalorder %s206, 0
        %p209 = pnand %p208, %p207
        %p210 = pneg %p209
        %s211 = sadd.s32 %s206, 2
        %s212 = scalar_select %p210, %s211, %s206
        %v213 = vld [vmem:[%s178] sm:$0xff]
        %214 = vst [vmem:[%s197] sm:$0xff] %v213
        %s215 = sand.u32 %s100, 1
        %s216 = scalar_lea.sflag [#allocation6], %s215
        %s217 = sand.u32 %s100, 1
        %s218 = smul.addr %s217, 8
        %s219 = scalar_lea.vmem [#allocation7], %s218
        // Predicated region
        $region29: #{tpu_custom_call.1} parent=23 // pred_check
          %p220 = pneg %p110
        $region30: #{tpu_custom_call.1} parent=23 // pred_check_branch
          %222 = sbr.rel (%p220) target = $region32
        $region31: #{tpu_custom_call.1} parent=23 // pred_region
          %224 = vsyncadd %s216, 0
          %s225 = sadd.s32 %s25, %s24
          %s226 = smul.addr %s225, 8
          %s227 = scalar_lea.hbm %s2, %s226
          %s229 = sshll.u32 %s219, 4
          %s230 = int_to_ptr.vmem [resolvable:$true] %s229
          %s231 = sshll.u32 %s227, 4
          %s232 = int_to_ptr.hbm [resolvable:$true] %s231
          %234 = dma.vmem_to_hbm [thread:$0]  %s230, 128, %s232, %s216
        $region32: #{tpu_custom_call.1} parent=23 // pred_fallthru
          _
      $region24: #{tpu_custom_call.1} parent=5 // pred_fallthru
        _
      %p235 = scmp.le.s32.totalorder 2, %s15
      // Predicated region
      $region33: #{tpu_custom_call.1} parent=5 // pred_check
        %p236 = pneg %p235
      $region34: #{tpu_custom_call.1} parent=5 // pred_check_branch
        %238 = sbr.rel (%p236) target = $region36
      $region35: #{tpu_custom_call.1} parent=5 // pred_region
        %s239 = ssub.s32 %s15, 2
        // Predicated region
        $region37: #{tpu_custom_call.1} parent=35 // pred_check
          %p240 = pneg %p116
        $region38: #{tpu_custom_call.1} parent=35 // pred_check_branch
          %242 = sbr.rel (%p240) target = $region40
        $region39: #{tpu_custom_call.1} parent=35 // pred_region
          %s243 = sand.u32 %s101, 1
          %s244 = scalar_lea.sflag [#allocation6], %s243
          %s245 = sand.u32 %s101, 1
          %s246 = smul.addr %s245, 8
          %s247 = scalar_lea.vmem [#allocation7], %s246
          %249 = dma.done %s244, 128
        $region40: #{tpu_custom_call.1} parent=35 // pred_fallthru
          _
      $region36: #{tpu_custom_call.1} parent=5 // pred_fallthru
        _
    $region6: #{tpu_custom_call.1} parent=1 // loop_footer
      %s19 = sadd.s32 1, %s15
    $region7: #{tpu_custom_call.1} parent=1 // loop_footer_branch
      %14 = sbr.rel target = $region3
    $region8: #{tpu_custom_call.1} parent=1 // loop_exit
      _
    %250 = vsyncpa [#allocation5], 1
    %s251 = scalar_lea.sflag [#allocation5], 1
    %252 = vsyncpa %s251, 1
    %253 = vsyncpa [#allocation6], 1
    %s254 = scalar_lea.sflag [#allocation6], 1
    %255 = vsyncpa %s254, 1

</llo_original>
